<compile_context>
chip_gen: v7x
topology: tpu7x:2x2x1
jax: 0.10.0
libtpu: 0.0.40
codegen_flags: <defaults>
</compile_context>

<pallas_src>
import jax
import jax.numpy as jnp
from jax import lax
from jax.experimental import pallas as pl
from jax.experimental.pallas import tpu as pltpu

LANES = 128
MAX_BLOCK_ROWS = 4096  # 4096 * 128 * 4 B = 2 MiB per f32 input tile


def _scaled_mse_block_kernel(nrows_ref, x_ref, t_ref, ss_ref, sa_ref):
    """Partial sums of diff^2 and |diff| for one (block_rows, 128) block."""
    i = pl.program_id(0)
    block_rows = x_ref.shape[0]

    d = x_ref[...].astype(jnp.float32) - t_ref[...].astype(jnp.float32)

    # The last grid step may extend past the true row count; Pallas pads that
    # block read with undefined data, so zero out the invalid rows before
    # reducing (zero contributes nothing to either sum).  This masking is
    # cheap VPU work fully hidden under the HBM-bound streaming.
    valid_rows = nrows_ref[0] - i * block_rows
    row_ids = lax.broadcasted_iota(jnp.int32, d.shape, 0)
    d = jnp.where(row_ids < valid_rows, d, 0.0)

    ss_ref[...] = jnp.sum(d * d).reshape(1, 1, 1)
    sa_ref[...] = jnp.sum(jnp.abs(d)).reshape(1, 1, 1)


def _partial_sums_pallas(x2, t2, rows, block_rows):
    """Run the kernel over a (rows, 128) view; return (sum_sq, sum_abs)."""
    num_blocks = pl.cdiv(rows, block_rows)
    nrows = jnp.array([rows], dtype=jnp.int32)

    ss_parts, sa_parts = pl.pallas_call(
        _scaled_mse_block_kernel,
        out_shape=(
            jax.ShapeDtypeStruct((num_blocks, 1, 1), jnp.float32),
            jax.ShapeDtypeStruct((num_blocks, 1, 1), jnp.float32),
        ),
        grid_spec=pltpu.PrefetchScalarGridSpec(
            num_scalar_prefetch=1,
            grid=(num_blocks,),
            in_specs=[
                pl.BlockSpec((block_rows, LANES), lambda i, nrows: (i, 0)),
                pl.BlockSpec((block_rows, LANES), lambda i, nrows: (i, 0)),
            ],
            out_specs=[
                pl.BlockSpec((1, 1, 1), lambda i, nrows: (i, 0, 0)),
                pl.BlockSpec((1, 1, 1), lambda i, nrows: (i, 0, 0)),
            ],
        ),
        compiler_params=pltpu.CompilerParams(
            dimension_semantics=("parallel",),
            vmem_limit_bytes=32 * 1024 * 1024,
        ),
    )(nrows, x2, t2)

    return jnp.sum(ss_parts), jnp.sum(sa_parts)


def scaled_mse_loss(inp, target, eps=1e-8):
    """Pallas implementation of ScaledMSELoss.forward (any input shape/dtype)."""
    assert inp.shape == target.shape, "input/target shapes must match"

    x = inp.reshape(-1)
    t = target.reshape(-1)
    n = x.shape[0]

    rows = n // LANES          # complete 128-lane rows covered by the kernel
    main = rows * LANES

    ss = jnp.zeros((), jnp.float32)
    sa = jnp.zeros((), jnp.float32)

    covered = 0
    if rows >= 8:
        # Largest 8-row-aligned block not exceeding the data; the last
        # (possibly partial) block is masked in-kernel, so no padding copy.
        block_rows = min(MAX_BLOCK_ROWS, (rows // 8) * 8)
        x2 = (x if main == n else x[:main]).reshape(rows, LANES)
        t2 = (t if main == n else t[:main]).reshape(rows, LANES)
        kss, ksa = _partial_sums_pallas(x2, t2, rows, block_rows)
        ss = ss + kss
        sa = sa + ksa
        covered = main

    if covered < n:
        # Tiny tail (< 128 elements, or the whole input if it is very small):
        # trivial pure-JAX partial sums combined before the division.
        d = x[covered:].astype(jnp.float32) - t[covered:].astype(jnp.float32)
        ss = ss + jnp.sum(d * d)
        sa = sa + jnp.sum(jnp.abs(d))

    return ss / (sa + jnp.float32(eps))


def _reference(x, y, eps=1e-8):
    d = x.astype(jnp.float32) - y.astype(jnp.float32)
    return jnp.sum(d * d) / (jnp.sum(jnp.abs(d)) + jnp.float32(eps))


if __name__ == "__main__":
    key = jax.random.PRNGKey(0)
    loss_fn = jax.jit(scaled_mse_loss)

    # Primary check: NCHW feature map, as in the style-transfer module.
    shape = (2, 4, 16, 16)
    k1, k2 = jax.random.split(key)
    x = jax.random.normal(k1, shape, dtype=jnp.float32)
    y = jax.random.normal(k2, shape, dtype=jnp.float32)
    loss = jax.block_until_ready(loss_fn(x, y))
    ref = _reference(x, y)
    assert jnp.allclose(loss, ref, rtol=1e-5, atol=1e-6), (loss, ref)

    # Ragged row count (rows=17, partial last block is masked in-kernel).
    shape2 = (2, 4, 17, 16)
    k3, k4 = jax.random.split(k1)
    x2 = jax.random.normal(k3, shape2, dtype=jnp.float32)
    y2 = jax.random.normal(k4, shape2, dtype=jnp.float32)
    loss2 = jax.block_until_ready(loss_fn(x2, y2))
    ref2 = _reference(x2, y2)
    assert jnp.allclose(loss2, ref2, rtol=1e-5, atol=1e-6), (loss2, ref2)

    # Lane-unaligned total element count (tail handled in plain JAX).
    shape3 = (3, 5, 7, 11)
    k5, k6 = jax.random.split(k2)
    x3 = jax.random.normal(k5, shape3, dtype=jnp.float32)
    y3 = jax.random.normal(k6, shape3, dtype=jnp.float32)
    loss3 = jax.block_until_ready(loss_fn(x3, y3))
    ref3 = _reference(x3, y3)
    assert jnp.allclose(loss3, ref3, rtol=1e-5, atol=1e-6), (loss3, ref3)

    # Native bf16 streaming (kernel casts per-tile in VMEM, no wrapper astype).
    k7, k8 = jax.random.split(k3)
    x4 = jax.random.normal(k7, shape, dtype=jnp.bfloat16)
    y4 = jax.random.normal(k8, shape, dtype=jnp.bfloat16)
    loss4 = jax.block_until_ready(loss_fn(x4, y4))
    ref4 = _reference(x4, y4)
    assert jnp.allclose(loss4, ref4, rtol=1e-3, atol=1e-5), (loss4, ref4)

    print("KERNEL_OK")
</pallas_src>

<mosaic_0001>
module attributes {stable_mosaic.version = 11 : i64} {
  func.func @_scaled_mse_block_kernel(%arg0: i32, %arg1: memref<1xi32, #tpu.memory_space<smem>>, %arg2: memref<16x128xf32, #tpu.memory_space<vmem>>, %arg3: memref<16x128xf32, #tpu.memory_space<vmem>>, %arg4: memref<1x1x1xf32, #tpu.memory_space<vmem>>, %arg5: memref<1x1x1xf32, #tpu.memory_space<vmem>>) attributes {dimension_semantics = [#tpu.dimension_semantics<parallel>], iteration_bounds = array<i64: 1>, scalar_prefetch = 1 : i64, scratch_operands = 0 : i64, tpu.core_type = #tpu.core_type<tc>, window_params = [{transform_indices = @transform_0, window_bounds = array<i64: 16, 128>}, {transform_indices = @transform_1, window_bounds = array<i64: 16, 128>}, {transform_indices = @transform_2, window_bounds = array<i64: 1, 1, 1>}, {transform_indices = @transform_3, window_bounds = array<i64: 1, 1, 1>}]} {
    %c0 = arith.constant 0 : index
    %c0_0 = arith.constant 0 : index
    %0 = vector.load %arg2[%c0, %c0_0] : memref<16x128xf32, #tpu.memory_space<vmem>>, vector<16x128xf32>
    %c0_1 = arith.constant 0 : index
    %c0_2 = arith.constant 0 : index
    %1 = vector.load %arg3[%c0_1, %c0_2] : memref<16x128xf32, #tpu.memory_space<vmem>>, vector<16x128xf32>
    %2 = arith.subf %0, %1 : vector<16x128xf32>
    %c0_3 = arith.constant 0 : index
    %3 = memref.load %arg1[%c0_3] : memref<1xi32, #tpu.memory_space<smem>>
    %c16_i32 = arith.constant 16 : i32
    %4 = arith.muli %arg0, %c16_i32 : i32
    %5 = arith.subi %3, %4 : i32
    %6 = tpu.iota {dimensions = array<i32: 0>} : vector<16x128xi32>
    %7 = vector.broadcast %5 : i32 to vector<16x128xi32>
    %8 = arith.cmpi slt, %6, %7 : vector<16x128xi32>
    %cst = arith.constant 0.000000e+00 : f32
    %9 = vector.broadcast %cst : f32 to vector<16x128xf32>
    %10 = arith.select %8, %2, %9 : vector<16x128xi1>, vector<16x128xf32>
    %11 = arith.mulf %10, %10 : vector<16x128xf32>
    %12 = vector.shape_cast %11 : vector<16x128xf32> to vector<1x16x128xf32>
    %cst_4 = arith.constant dense<0.000000e+00> : vector<1xf32>
    %13 = vector.multi_reduction <add>, %12, %cst_4 [1, 2] : vector<1x16x128xf32> to vector<1xf32>
    %14 = vector.shape_cast %13 : vector<1xf32> to vector<1x1x1xf32>
    %15 = vector.extract %14[0, 0, 0] : f32 from vector<1x1x1xf32>
    %16 = vector.broadcast %15 : f32 to vector<1x1x1xf32>
    %c0_5 = arith.constant 0 : index
    %c0_6 = arith.constant 0 : index
    %c0_7 = arith.constant 0 : index
    %17 = vector.load %arg4[%c0_5, %c0_6, %c0_7] : memref<1x1x1xf32, #tpu.memory_space<vmem>>, vector<1x1x1xf32>
    tpu.vector_store %arg4[%c0_5, %c0_6, %c0_7], %16 {strides = array<i32>} : memref<1x1x1xf32, #tpu.memory_space<vmem>>, vector<1x1x1xf32>,
    %18 = math.absf %10 : vector<16x128xf32>
    %19 = vector.shape_cast %18 : vector<16x128xf32> to vector<1x16x128xf32>
    %cst_8 = arith.constant dense<0.000000e+00> : vector<1xf32>
    %20 = vector.multi_reduction <add>, %19, %cst_8 [1, 2] : vector<1x16x128xf32> to vector<1xf32>
    %21 = vector.shape_cast %20 : vector<1xf32> to vector<1x1x1xf32>
    %22 = vector.extract %21[0, 0, 0] : f32 from vector<1x1x1xf32>
    %23 = vector.broadcast %22 : f32 to vector<1x1x1xf32>
    %c0_9 = arith.constant 0 : index
    %c0_10 = arith.constant 0 : index
    %c0_11 = arith.constant 0 : index
    %24 = vector.load %arg5[%c0_9, %c0_10, %c0_11] : memref<1x1x1xf32, #tpu.memory_space<vmem>>, vector<1x1x1xf32>
    tpu.vector_store %arg5[%c0_9, %c0_10, %c0_11], %23 {strides = array<i32>} : memref<1x1x1xf32, #tpu.memory_space<vmem>>, vector<1x1x1xf32>,
    return
  }
  func.func @transform_0(%arg0: i32, %arg1: memref<1xi32, #tpu.memory_space<smem>>) -> (i32, i32) {
    %c0_i32 = arith.constant 0 : i32
    %c0_i32_0 = arith.constant 0 : i32
    return %arg0, %c0_i32 : i32, i32
  }
  func.func @transform_1(%arg0: i32, %arg1: memref<1xi32, #tpu.memory_space<smem>>) -> (i32, i32) {
    %c0_i32 = arith.constant 0 : i32
    %c0_i32_0 = arith.constant 0 : i32
    return %arg0, %c0_i32 : i32, i32
  }
  func.func @transform_2(%arg0: i32, %arg1: memref<1xi32, #tpu.memory_space<smem>>) -> (i32, i32, i32) {
    %c0_i32 = arith.constant 0 : i32
    %c0_i32_0 = arith.constant 0 : i32
    %c0_i32_1 = arith.constant 0 : i32
    return %arg0, %c0_i32, %c0_i32_0 : i32, i32, i32
  }
  func.func @transform_3(%arg0: i32, %arg1: memref<1xi32, #tpu.memory_space<smem>>) -> (i32, i32, i32) {
    %c0_i32 = arith.constant 0 : i32
    %c0_i32_0 = arith.constant 0 : i32
    %c0_i32_1 = arith.constant 0 : i32
    return %arg0, %c0_i32, %c0_i32_0 : i32, i32, i32
  }
}

</mosaic_0001>

<llo_original>
// kernel: scaled_mse_loss.1
$region0: #{scaled_mse_loss.1}
  #allocation0 [shape = 'u32[]', space=smem, size = 0x4, offset = 0x4, fixed_abs, tag = 'smem constant byte address 0x4 - core index']
  #allocation1 [shape = 'u32[144,128]{1,0:T(1,128)}', space=vmem, size = 0x12000, scoped, tag = 'internal scratch']
  #allocation2 [shape = 's32[1]{0}', space=sflag, size = 0x4, scoped, tag = 'scoped memory for scaled_mse_loss.1']
  #allocation3 [shape = 's32[1]{0:T(128)S(6)}', space=smem, size = 0x200, scoped, tag = 'prefetched SMEM operand 0']
  %s0 = inlined_call_operand.<no memory space> [shape: s32[1], index: 0, kind: input, shape index: {}]
  %s1 = inlined_call_operand.vmem [shape: f32[16,128], index: 1, kind: input, shape index: {}]
  %s2 = inlined_call_operand.vmem [shape: f32[16,128], index: 2, kind: input, shape index: {}]
  %s3 = inlined_call_operand.hbm [shape: f32[1,1,1], index: 3, kind: output, shape index: {0}]
  %s4 = inlined_call_operand.hbm [shape: f32[1,1,1], index: 4, kind: output, shape index: {1}]
  %5 = xla_tuple %s3, %s4
  %s6 = sld [smem:[#allocation0]]
  $region26: #{scaled_mse_loss.1} parent=0
    _
  %s8 = ssub.s32 1, %s6
  %s9 = scalar_select 0, %s8, %s6
  %10 = sst [smem:[#allocation3]] %s0
  $region1: #{scaled_mse_loss.1} parent=0
    #allocation4 [shape = 'u8[512]{0}', space=vmem, size = 0x400, scoped, tag = 'output window, operand 0, single buffered']
    #allocation5 [shape = 's32[1]{0}', space=sflag, size = 0x4, scoped, tag = 'scoped memory for scaled_mse_loss.1']
    #allocation6 [shape = 'u8[512]{0}', space=vmem, size = 0x400, scoped, tag = 'output window, operand 1, single buffered']
    #allocation7 [shape = 's32[1]{0}', space=sflag, size = 0x4, scoped, tag = 'scoped memory for scaled_mse_loss.1']
    %11 = vsyncpa [#allocation5], 0
    %12 = vsyncpa [#allocation7], 0
    // Predicated region
    $region2: #{scaled_mse_loss.1} parent=1 // pred_check
      _
    $region3: #{scaled_mse_loss.1} parent=1 // pred_check_branch
      %14 = sbr.rel (0) target = $region5
    $region4: #{scaled_mse_loss.1} parent=1 // pred_region
      _
    $region5: #{scaled_mse_loss.1} parent=1 // pred_fallthru
      _
    // Predicated region
    $region6: #{scaled_mse_loss.1} parent=1 // pred_check
      _
    $region7: #{scaled_mse_loss.1} parent=1 // pred_check_branch
      %16 = sbr.rel (0) target = $region9
    $region8: #{scaled_mse_loss.1} parent=1 // pred_region
      _
    $region9: #{scaled_mse_loss.1} parent=1 // pred_fallthru
      _
    %v17 = vld [vmem:[%s1] sm:$0xff]
    %v18 = vld [vmem:[%s1 + $0x8] sm:$0xff]
    %v19 = vld [vmem:[%s2] sm:$0xff]
    %v20 = vld [vmem:[%s2 + $0x8] sm:$0xff]
    %v21 = vsub.f32 %v17, %v19
    %v22 = vsub.f32 %v18, %v20
    %s23 = sld [smem:[#allocation3]]
    %s24 = smul.u32 0, 16
    %s25 = ssub.s32 %s23, %s24
    %v26 = vlaneseq
    %v27 = vshrl.u32 %v26, 7
    %v28 = vadd.s32 %v27, 8
    %v29 = vstv %s25
    %vm30 = vcmp.lt.s32.totalorder %v27, %v29
    %vm31 = vcmp.lt.s32.totalorder %v28, %v29
    %v32 = vsel %vm30, %v21, 0.0
    %v33 = vsel %vm31, %v22, 0.0
    %v34 = vmul.f32 %v32, %v32
    %v35 = vmul.f32 %v33, %v33
    %v36 = vadd.f32 %v34, %v35
    %37 = vadd.xlane.f32.xlu0 %v36
    %v38 = vpop.xlane.xlu0 %37
    %v39 = vrot.slane %v38, 4
    %v40 = vadd.f32 %v38, %v39
    %v41 = vrot.slane %v40, 2
    %v42 = vadd.f32 %v40, %v41
    %v43 = vrot.slane %v42, 1
    %v44 = vadd.f32 %v42, %v43
    %s45 = vtos %v44
    %v46 = vstv %s45
    %vm47 = vcmask 0
    %48 = vst.msk [vmem:[#allocation4] sm:$0x1] %vm47, %v46
    %v49 = vand.u32 2147483647, %v32
    %v50 = vand.u32 2147483647, %v33
    %v51 = vadd.f32 %v49, %v50
    %52 = vadd.xlane.f32.xlu0 %v51
    %v53 = vpop.xlane.xlu0 %52
    %v54 = vrot.slane %v53, 4
    %v55 = vadd.f32 %v53, %v54
    %v56 = vrot.slane %v55, 2
    %v57 = vadd.f32 %v55, %v56
    %v58 = vrot.slane %v57, 1
    %v59 = vadd.f32 %v57, %v58
    %s60 = vtos %v59
    %v61 = vstv %s60
    %62 = vst.msk [vmem:[#allocation6] sm:$0x1] %vm47, %v61
    // Predicated region
    $region10: #{scaled_mse_loss.1} parent=1 // pred_check
      _
    $region11: #{scaled_mse_loss.1} parent=1 // pred_check_branch
      %64 = sbr.rel (0) target = $region13
    $region12: #{scaled_mse_loss.1} parent=1 // pred_region
      %s66 = ssub.s32 16, 16
      %67 = vsyncadd [#allocation5], %s66
      %s69 = sshll.u32 [#allocation4], 4
      %s70 = int_to_ptr.vmem [resolvable:$true] %s69
      %72 = dma.vmem_to_hbm [thread:$0]  %s70, 16, %s3, [#allocation5]
    $region13: #{scaled_mse_loss.1} parent=1 // pred_fallthru
      _
    // Predicated region
    $region14: #{scaled_mse_loss.1} parent=1 // pred_check
      _
    $region15: #{scaled_mse_loss.1} parent=1 // pred_check_branch
      %74 = sbr.rel (0) target = $region17
    $region16: #{scaled_mse_loss.1} parent=1 // pred_region
      %s76 = ssub.s32 16, 16
      %77 = vsyncadd [#allocation7], %s76
      %s79 = sshll.u32 [#allocation6], 4
      %s80 = int_to_ptr.vmem [resolvable:$true] %s79
      %82 = dma.vmem_to_hbm [thread:$0]  %s80, 16, %s4, [#allocation7]
    $region17: #{scaled_mse_loss.1} parent=1 // pred_fallthru
      _
    // Predicated region
    $region18: #{scaled_mse_loss.1} parent=1 // pred_check
      _
    $region19: #{scaled_mse_loss.1} parent=1 // pred_check_branch
      %84 = sbr.rel (0) target = $region21
    $region20: #{scaled_mse_loss.1} parent=1 // pred_region
      %85 = dma.done [#allocation5], 16
    $region21: #{scaled_mse_loss.1} parent=1 // pred_fallthru
      _
    // Predicated region
    $region22: #{scaled_mse_loss.1} parent=1 // pred_check
      _
    $region23: #{scaled_mse_loss.1} parent=1 // pred_check_branch
      %87 = sbr.rel (0) target = $region25
    $region24: #{scaled_mse_loss.1} parent=1 // pred_region
      %88 = dma.done [#allocation7], 16
    $region25: #{scaled_mse_loss.1} parent=1 // pred_fallthru
      _
    %89 = vsyncpa [#allocation5], 1
    %90 = vsyncpa [#allocation7], 1

</llo_original>
